<compile_context>
chip_gen: v6e
topology: v6e:2x2x1
jax: 0.10.0
libtpu: 0.0.40
codegen_flags: <defaults>
</compile_context>

<pallas_src>
import math

import jax
import jax.numpy as jnp
from jax import lax
from jax.experimental import pallas as pl
from jax.experimental.pallas import tpu as pltpu

_TWO_PI = 2.0 * math.pi
_INV_TWO_PI = 1.0 / _TWO_PI
_ANGLE_IDX = 4


def _wrap_angle(a):
    # wrap into [-pi, pi):  a - 2*pi*floor((a + pi) * (1/(2*pi)))
    return a - _TWO_PI * jnp.floor((a + math.pi) * _INV_TWO_PI)


def refine_kernel(x_ref, w_ref, b_ref, o_ref):
    # x_ref: (N, D)  -- objects on sublanes, features on lanes
    # w_ref: (3, D, D) stacked weights in PyTorch (out, in) layout
    # b_ref: (3, 1, D) stacked biases, lane-dense (sublane-broadcast add)
    x = x_ref[...]

    # y = x @ W.T  ==  dot_general contracting dim 1 of x with dim 1 of W.
    dn = (((1,), (1,)), ((), ()))
    h = jnp.maximum(
        lax.dot_general(x, w_ref[0], dn, preferred_element_type=jnp.float32)
        + b_ref[0], 0.0)
    h = jnp.maximum(
        lax.dot_general(h, w_ref[1], dn, preferred_element_type=jnp.float32)
        + b_ref[1], 0.0)
    out = (lax.dot_general(h, w_ref[2], dn, preferred_element_type=jnp.float32)
           + b_ref[2])

    # Angle handling on lane column 4; mask built once and reused.
    col = lax.broadcasted_iota(jnp.int32, out.shape, 1)
    is_angle = col == _ANGLE_IDX

    out = jnp.where(is_angle, _wrap_angle(out), out)
    tmp = out + x
    tmp = jnp.where(is_angle, _wrap_angle(tmp), tmp)

    o_ref[...] = tmp.astype(o_ref.dtype)


def pack_params(w1, b1, w2, b2, w3, b3):
    """Init-time packing: stacked weights (3,D,D) + lane-dense biases (3,1,D)."""
    W = jnp.stack([w1, w2, w3]).astype(jnp.float32)                 # (3, D, D)
    B = jnp.stack([b1, b2, b3]).astype(jnp.float32)[:, None, :]     # (3, 1, D)
    return W, B


@jax.jit
def refine_3d_easy(x, W, B):
    """x: (N, D) float32. W: (3, D, D) PyTorch-layout weights. B: (3, 1, D)."""
    N, D = x.shape
    cost = pl.CostEstimate(
        flops=3 * 2 * D * D * N,
        transcendentals=0,
        bytes_accessed=4 * (x.size + W.size + B.size + x.size),
    )
    vmem_spec = pl.BlockSpec(memory_space=pltpu.MemorySpace.VMEM)
    return pl.pallas_call(
        refine_kernel,
        out_shape=jax.ShapeDtypeStruct((N, D), jnp.float32),
        in_specs=[vmem_spec, vmem_spec, vmem_spec],
        out_specs=vmem_spec,
        cost_estimate=cost,
        # No grid: single invocation; whole working set is a few vregs.
    )(x.astype(jnp.float32), W, B)


def init_linear_params(key, d_in, d_out):
    # PyTorch nn.Linear default init: U(-k, k), k = 1/sqrt(fan_in).
    # Weight kept in PyTorch layout (out_features, in_features).
    k = 1.0 / jnp.sqrt(jnp.float32(d_in))
    kw, kb = jax.random.split(key)
    w = jax.random.uniform(kw, (d_out, d_in), jnp.float32, -k, k)
    b = jax.random.uniform(kb, (d_out,), jnp.float32, -k, k)
    return w, b


def reference(x, w1, b1, w2, b2, w3, b3):
    h = jnp.maximum(x @ w1.T + b1, 0.0)
    h = jnp.maximum(h @ w2.T + b2, 0.0)
    out = h @ w3.T + b3
    out = out.at[:, _ANGLE_IDX].set(_wrap_angle(out[:, _ANGLE_IDX]))
    tmp = out + x
    tmp = tmp.at[:, _ANGLE_IDX].set(_wrap_angle(tmp[:, _ANGLE_IDX]))
    return tmp


if __name__ == "__main__":
    N, D = 16, 8          # 16 objects, input_size = 8 (angle at column 4)
    key = jax.random.PRNGKey(0)
    kx, k1, k2, k3 = jax.random.split(key, 4)

    x = jax.random.normal(kx, (N, D), jnp.float32) * 2.0
    w1, b1 = init_linear_params(k1, D, D)
    w2, b2 = init_linear_params(k2, D, D)
    w3, b3 = init_linear_params(k3, D, D)

    # Parameters packed once at init, outside the per-call path.
    W, B = pack_params(w1, b1, w2, b2, w3, b3)

    y = refine_3d_easy(x, W, B)
    y = jax.block_until_ready(y)

    y_ref = reference(x, w1, b1, w2, b2, w3, b3)
    assert y.shape == (N, D)
    assert jnp.allclose(y, y_ref, atol=1e-5, rtol=1e-5), "mismatch vs reference"

    print("KERNEL_OK")
</pallas_src>

<mosaic_0001>
module attributes {stable_mosaic.version = 11 : i64} {
  func.func @refine_kernel(%arg0: memref<16x8xf32, #tpu.memory_space<vmem>>, %arg1: memref<3x8x8xf32, #tpu.memory_space<vmem>>, %arg2: memref<3x1x8xf32, #tpu.memory_space<vmem>>, %arg3: memref<16x8xf32, #tpu.memory_space<vmem>>) attributes {dimension_semantics = [], scalar_prefetch = 0 : i64, scratch_operands = 0 : i64, tpu.core_type = #tpu.core_type<tc>} {
    %c0 = arith.constant 0 : index
    %c0_0 = arith.constant 0 : index
    %0 = vector.load %arg0[%c0, %c0_0] : memref<16x8xf32, #tpu.memory_space<vmem>>, vector<16x8xf32>
    %c0_1 = arith.constant 0 : index
    %c0_2 = arith.constant 0 : index
    %c0_3 = arith.constant 0 : index
    %1 = vector.load %arg1[%c0_1, %c0_2, %c0_3] : memref<3x8x8xf32, #tpu.memory_space<vmem>>, vector<1x8x8xf32>
    %2 = vector.shape_cast %1 : vector<1x8x8xf32> to vector<8x8xf32>
    %cst = arith.constant dense<0.000000e+00> : vector<16x8xf32>
    %3 = tpu.matmul %0, %2, %cst {dimension_numbers = #tpu.dot_dimension_numbers<[1], [1], [0], [0], [0, 0, 1, 0], [], []>} : vector<16x8xf32>, vector<8x8xf32>, vector<16x8xf32> -> vector<16x8xf32>
    %c0_4 = arith.constant 0 : index
    %c0_5 = arith.constant 0 : index
    %c0_6 = arith.constant 0 : index
    %4 = vector.load %arg2[%c0_4, %c0_5, %c0_6] : memref<3x1x8xf32, #tpu.memory_space<vmem>>, vector<1x1x8xf32>
    %5 = vector.shape_cast %4 : vector<1x1x8xf32> to vector<1x8xf32>
    %6 = vector.broadcast %5 : vector<1x8xf32> to vector<16x8xf32>
    %7 = arith.addf %3, %6 : vector<16x8xf32>
    %cst_7 = arith.constant 0.000000e+00 : f32
    %8 = vector.broadcast %cst_7 : f32 to vector<16x8xf32>
    %9 = arith.maximumf %7, %8 : vector<16x8xf32>
    %c1 = arith.constant 1 : index
    %c0_8 = arith.constant 0 : index
    %c0_9 = arith.constant 0 : index
    %10 = vector.load %arg1[%c1, %c0_8, %c0_9] : memref<3x8x8xf32, #tpu.memory_space<vmem>>, vector<1x8x8xf32>
    %11 = vector.shape_cast %10 : vector<1x8x8xf32> to vector<8x8xf32>
    %cst_10 = arith.constant dense<0.000000e+00> : vector<16x8xf32>
    %12 = tpu.matmul %9, %11, %cst_10 {dimension_numbers = #tpu.dot_dimension_numbers<[1], [1], [0], [0], [0, 0, 1, 0], [], []>} : vector<16x8xf32>, vector<8x8xf32>, vector<16x8xf32> -> vector<16x8xf32>
    %c1_11 = arith.constant 1 : index
    %c0_12 = arith.constant 0 : index
    %c0_13 = arith.constant 0 : index
    %13 = vector.load %arg2[%c1_11, %c0_12, %c0_13] : memref<3x1x8xf32, #tpu.memory_space<vmem>>, vector<1x1x8xf32>
    %14 = vector.shape_cast %13 : vector<1x1x8xf32> to vector<1x8xf32>
    %15 = vector.broadcast %14 : vector<1x8xf32> to vector<16x8xf32>
    %16 = arith.addf %12, %15 : vector<16x8xf32>
    %cst_14 = arith.constant 0.000000e+00 : f32
    %17 = vector.broadcast %cst_14 : f32 to vector<16x8xf32>
    %18 = arith.maximumf %16, %17 : vector<16x8xf32>
    %c2 = arith.constant 2 : index
    %c0_15 = arith.constant 0 : index
    %c0_16 = arith.constant 0 : index
    %19 = vector.load %arg1[%c2, %c0_15, %c0_16] : memref<3x8x8xf32, #tpu.memory_space<vmem>>, vector<1x8x8xf32>
    %20 = vector.shape_cast %19 : vector<1x8x8xf32> to vector<8x8xf32>
    %cst_17 = arith.constant dense<0.000000e+00> : vector<16x8xf32>
    %21 = tpu.matmul %18, %20, %cst_17 {dimension_numbers = #tpu.dot_dimension_numbers<[1], [1], [0], [0], [0, 0, 1, 0], [], []>} : vector<16x8xf32>, vector<8x8xf32>, vector<16x8xf32> -> vector<16x8xf32>
    %c2_18 = arith.constant 2 : index
    %c0_19 = arith.constant 0 : index
    %c0_20 = arith.constant 0 : index
    %22 = vector.load %arg2[%c2_18, %c0_19, %c0_20] : memref<3x1x8xf32, #tpu.memory_space<vmem>>, vector<1x1x8xf32>
    %23 = vector.shape_cast %22 : vector<1x1x8xf32> to vector<1x8xf32>
    %24 = vector.broadcast %23 : vector<1x8xf32> to vector<16x8xf32>
    %25 = arith.addf %21, %24 : vector<16x8xf32>
    %26 = tpu.iota {dimensions = array<i32: 1>} : vector<16x8xi32>
    %c4_i32 = arith.constant 4 : i32
    %27 = vector.broadcast %c4_i32 : i32 to vector<16x8xi32>
    %28 = arith.cmpi eq, %26, %27 : vector<16x8xi32>
    %cst_21 = arith.constant 3.14159274 : f32
    %29 = vector.broadcast %cst_21 : f32 to vector<16x8xf32>
    %30 = arith.addf %25, %29 : vector<16x8xf32>
    %cst_22 = arith.constant 0.159154937 : f32
    %31 = vector.broadcast %cst_22 : f32 to vector<16x8xf32>
    %32 = arith.mulf %30, %31 : vector<16x8xf32>
    %33 = math.floor %32 : vector<16x8xf32>
    %cst_23 = arith.constant 6.28318548 : f32
    %34 = vector.broadcast %cst_23 : f32 to vector<16x8xf32>
    %35 = arith.mulf %34, %33 : vector<16x8xf32>
    %36 = arith.subf %25, %35 : vector<16x8xf32>
    %37 = arith.select %28, %36, %25 : vector<16x8xi1>, vector<16x8xf32>
    %38 = arith.addf %37, %0 : vector<16x8xf32>
    %cst_24 = arith.constant 3.14159274 : f32
    %39 = vector.broadcast %cst_24 : f32 to vector<16x8xf32>
    %40 = arith.addf %38, %39 : vector<16x8xf32>
    %cst_25 = arith.constant 0.159154937 : f32
    %41 = vector.broadcast %cst_25 : f32 to vector<16x8xf32>
    %42 = arith.mulf %40, %41 : vector<16x8xf32>
    %43 = math.floor %42 : vector<16x8xf32>
    %cst_26 = arith.constant 6.28318548 : f32
    %44 = vector.broadcast %cst_26 : f32 to vector<16x8xf32>
    %45 = arith.mulf %44, %43 : vector<16x8xf32>
    %46 = arith.subf %38, %45 : vector<16x8xf32>
    %47 = arith.select %28, %46, %38 : vector<16x8xi1>, vector<16x8xf32>
    %c0_27 = arith.constant 0 : index
    %c0_28 = arith.constant 0 : index
    %48 = vector.load %arg3[%c0_27, %c0_28] : memref<16x8xf32, #tpu.memory_space<vmem>>, vector<16x8xf32>
    tpu.vector_store %arg3[%c0_27, %c0_28], %47 {strides = array<i32>} : memref<16x8xf32, #tpu.memory_space<vmem>>, vector<16x8xf32>,
    return
  }
}

</mosaic_0001>

<llo_original>
// kernel: refine_3d_easy.1
$region0: #{refine_3d_easy.1}
  #allocation0 [shape = 'u32[]', space=smem, size = 0x4, offset = 0x4, fixed_abs, tag = 'smem constant byte address 0x4 - core index']
  #allocation1 [shape = 'u32[144,128]{1,0:T(1,128)}', space=vmem, size = 0x12000, scoped, tag = 'internal scratch']
  %s0 = inlined_call_operand.vmem [shape: f32[16,8], index: 0, kind: input, shape index: {}]
  %s1 = inlined_call_operand.vmem [shape: f32[3,8,8], index: 1, kind: input, shape index: {}]
  %s2 = inlined_call_operand.vmem [shape: f32[3,1,8], index: 2, kind: input, shape index: {}]
  %s3 = inlined_call_operand.vmem [shape: f32[16,8], index: 3, kind: output, shape index: {}]
  %s4 = sld [smem:[#allocation0]]
  $region22: #{refine_3d_easy.1} parent=0
    _
  %s6 = ssub.s32 1, %s4
  %s7 = scalar_select 0, %s6, %s4
  // Predicated region
  $region2: #{refine_3d_easy.1} parent=0 // pred_check
    _
  $region3: #{refine_3d_easy.1} parent=0 // pred_check_branch
    %9 = sbr.rel (0) target = $region5
  $region4: #{refine_3d_easy.1} parent=0 // pred_region
    _
  $region5: #{refine_3d_easy.1} parent=0 // pred_fallthru
    _
  // Predicated region
  $region6: #{refine_3d_easy.1} parent=0 // pred_check
    _
  $region7: #{refine_3d_easy.1} parent=0 // pred_check_branch
    %11 = sbr.rel (0) target = $region9
  $region8: #{refine_3d_easy.1} parent=0 // pred_region
    _
  $region9: #{refine_3d_easy.1} parent=0 // pred_fallthru
    _
  // Predicated region
  $region10: #{refine_3d_easy.1} parent=0 // pred_check
    _
  $region11: #{refine_3d_easy.1} parent=0 // pred_check_branch
    %13 = sbr.rel (0) target = $region13
  $region12: #{refine_3d_easy.1} parent=0 // pred_region
    _
  $region13: #{refine_3d_easy.1} parent=0 // pred_fallthru
    _
  %v14 = vld [vmem:[%s0] sm:$0xff]
  %v15 = vld [vmem:[%s0 + $0x8] sm:$0xff]
  %v16 = vld [vmem:[%s1] sm:$0xff]
  %v17 = vld [vmem:[%s2] sm:$0x1]
  %v19 = vlaneseq
  %v20 = vshrl.u32 %v19, 7
  %v21 = vsub.s32 0, %v20
  %v22 = vrot.slane %v17, %v21
  %vm24 = vcmask 64512
  %v26 = vsel %vm24, %v14, 0
  %v29 = vsel %vm24, %v15, 0
  %v32 = vsel %vm24, %v16, 0
  %34 = vmatprep.subr.mxu0 0.0
  %35 = vmatpush1.xpose.msra.mxu0 0.0
  %36 = vmatprep.subr.mxu0 0.0
  %37 = vmatpush1.xpose.msra.mxu0 0.0
  %38 = vmatprep.subr.mxu0 0.0
  %39 = vmatpush1.xpose.msra.mxu0 0.0
  %40 = vmatprep.subr.mxu0 0.0
  %41 = vmatpush1.xpose.msra.mxu0 0.0
  %42 = vmatprep.subr.mxu0 0.0
  %43 = vmatpush1.xpose.msra.mxu0 0.0
  %44 = vmatprep.subr.mxu0 0.0
  %45 = vmatpush1.xpose.msra.mxu0 0.0
  %46 = vmatprep.subr.mxu0 0.0
  %47 = vmatpush1.xpose.msra.mxu0 0.0
  %48 = vmatprep.subr.mxu0 0.0
  %49 = vmatpush1.xpose.msra.mxu0 0.0
  %50 = vmatprep.subr.mxu0 0.0
  %51 = vmatpush1.xpose.msra.mxu0 0.0
  %52 = vmatprep.subr.mxu0 0.0
  %53 = vmatpush1.xpose.msra.mxu0 0.0
  %54 = vmatprep.subr.mxu0 0.0
  %55 = vmatpush1.xpose.msra.mxu0 0.0
  %56 = vmatprep.subr.mxu0 0.0
  %57 = vmatpush1.xpose.msra.mxu0 0.0
  %58 = vmatprep.subr.mxu0 0.0
  %59 = vmatpush1.xpose.msra.mxu0 0.0
  %60 = vmatprep.subr.mxu0 0.0
  %61 = vmatpush1.xpose.msra.mxu0 0.0
  %62 = vmatprep.subr.mxu0 0.0
  %63 = vmatpush1.xpose.msra.mxu0 0.0
  %64 = vmatprep.subr.mxu0 0.0
  %65 = vmatpush1.xpose.msra.mxu0 %v32
  %66 = vmatprep.subr.mxu0 0.0
  %67 = vmatpush2.xpose.msra.mxu0 0.0
  %68 = vmatprep.subr.mxu0 0.0
  %69 = vmatpush2.xpose.msra.mxu0 0.0
  %70 = vmatprep.subr.mxu0 0.0
  %71 = vmatpush2.xpose.msra.mxu0 0.0
  %72 = vmatprep.subr.mxu0 0.0
  %73 = vmatpush2.xpose.msra.mxu0 0.0
  %74 = vmatprep.subr.mxu0 0.0
  %75 = vmatpush2.xpose.msra.mxu0 0.0
  %76 = vmatprep.subr.mxu0 0.0
  %77 = vmatpush2.xpose.msra.mxu0 0.0
  %78 = vmatprep.subr.mxu0 0.0
  %79 = vmatpush2.xpose.msra.mxu0 0.0
  %80 = vmatprep.subr.mxu0 0.0
  %81 = vmatpush2.xpose.msra.mxu0 0.0
  %82 = vmatprep.subr.mxu0 0.0
  %83 = vmatpush2.xpose.msra.mxu0 0.0
  %84 = vmatprep.subr.mxu0 0.0
  %85 = vmatpush2.xpose.msra.mxu0 0.0
  %86 = vmatprep.subr.mxu0 0.0
  %87 = vmatpush2.xpose.msra.mxu0 0.0
  %88 = vmatprep.subr.mxu0 0.0
  %89 = vmatpush2.xpose.msra.mxu0 0.0
  %90 = vmatprep.subr.mxu0 0.0
  %91 = vmatpush2.xpose.msra.mxu0 0.0
  %92 = vmatprep.subr.mxu0 0.0
  %93 = vmatpush2.xpose.msra.mxu0 0.0
  %94 = vmatprep.subr.mxu0 0.0
  %95 = vmatpush2.xpose.msra.mxu0 0.0
  %96 = vmatprep.subr.mxu0 0.0
  %97 = vmatpush2.xpose.msra.mxu0 0.0
  %98 = vmatprep.mubr.f32.mxu0 0.0
  %99 = vmatmul.mubr.f32.gmra.mxu0 %v26
  %v100 = vpop.f32.mrf.mxu0
  %v101 = vadd.f32 %v22, %v100
  %v102 = vpop.f32.mrf.mxu0
  %103 = vmatprep.mubr.f32.mxu0 0.0
  %104 = vmatmul.mubr.f32.gmra.mxu0 %v29
  %v105 = vpop.f32.mrf.mxu0
  %v106 = vadd.f32 %v22, %v105
  %v107 = vpop.f32.mrf.mxu0
  %108 = vdwg.mxu0
  %v109 = vmax.f32 %v101, 0.0
  %v110 = vmax.f32 %v106, 0.0
  %s111 = scalar_lea.vmem %s1, 8
  %v112 = vld [vmem:[%s111] sm:$0xff]
  %s113 = scalar_lea.vmem %s2, 1
  %v114 = vld [vmem:[%s113] sm:$0x1]
  %v116 = vlaneseq
  %v117 = vshrl.u32 %v116, 7
  %v118 = vsub.s32 0, %v117
  %v119 = vrot.slane %v114, %v118
  %v122 = vsel %vm24, %v109, 0
  %v125 = vsel %vm24, %v110, 0
  %v128 = vsel %vm24, %v112, 0
  %130 = vmatprep.subr.mxu0 0.0
  %131 = vmatpush1.xpose.msra.mxu0 0.0
  %132 = vmatprep.subr.mxu0 0.0
  %133 = vmatpush1.xpose.msra.mxu0 0.0
  %134 = vmatprep.subr.mxu0 0.0
  %135 = vmatpush1.xpose.msra.mxu0 0.0
  %136 = vmatprep.subr.mxu0 0.0
  %137 = vmatpush1.xpose.msra.mxu0 0.0
  %138 = vmatprep.subr.mxu0 0.0
  %139 = vmatpush1.xpose.msra.mxu0 0.0
  %140 = vmatprep.subr.mxu0 0.0
  %141 = vmatpush1.xpose.msra.mxu0 0.0
  %142 = vmatprep.subr.mxu0 0.0
  %143 = vmatpush1.xpose.msra.mxu0 0.0
  %144 = vmatprep.subr.mxu0 0.0
  %145 = vmatpush1.xpose.msra.mxu0 0.0
  %146 = vmatprep.subr.mxu0 0.0
  %147 = vmatpush1.xpose.msra.mxu0 0.0
  %148 = vmatprep.subr.mxu0 0.0
  %149 = vmatpush1.xpose.msra.mxu0 0.0
  %150 = vmatprep.subr.mxu0 0.0
  %151 = vmatpush1.xpose.msra.mxu0 0.0
  %152 = vmatprep.subr.mxu0 0.0
  %153 = vmatpush1.xpose.msra.mxu0 0.0
  %154 = vmatprep.subr.mxu0 0.0
  %155 = vmatpush1.xpose.msra.mxu0 0.0
  %156 = vmatprep.subr.mxu0 0.0
  %157 = vmatpush1.xpose.msra.mxu0 0.0
  %158 = vmatprep.subr.mxu0 0.0
  %159 = vmatpush1.xpose.msra.mxu0 0.0
  %160 = vmatprep.subr.mxu0 0.0
  %161 = vmatpush1.xpose.msra.mxu0 %v128
  %162 = vmatprep.subr.mxu0 0.0
  %163 = vmatpush2.xpose.msra.mxu0 0.0
  %164 = vmatprep.subr.mxu0 0.0
  %165 = vmatpush2.xpose.msra.mxu0 0.0
  %166 = vmatprep.subr.mxu0 0.0
  %167 = vmatpush2.xpose.msra.mxu0 0.0
  %168 = vmatprep.subr.mxu0 0.0
  %169 = vmatpush2.xpose.msra.mxu0 0.0
  %170 = vmatprep.subr.mxu0 0.0
  %171 = vmatpush2.xpose.msra.mxu0 0.0
  %172 = vmatprep.subr.mxu0 0.0
  %173 = vmatpush2.xpose.msra.mxu0 0.0
  %174 = vmatprep.subr.mxu0 0.0
  %175 = vmatpush2.xpose.msra.mxu0 0.0
  %176 = vmatprep.subr.mxu0 0.0
  %177 = vmatpush2.xpose.msra.mxu0 0.0
  %178 = vmatprep.subr.mxu0 0.0
  %179 = vmatpush2.xpose.msra.mxu0 0.0
  %180 = vmatprep.subr.mxu0 0.0
  %181 = vmatpush2.xpose.msra.mxu0 0.0
  %182 = vmatprep.subr.mxu0 0.0
  %183 = vmatpush2.xpose.msra.mxu0 0.0
  %184 = vmatprep.subr.mxu0 0.0
  %185 = vmatpush2.xpose.msra.mxu0 0.0
  %186 = vmatprep.subr.mxu0 0.0
  %187 = vmatpush2.xpose.msra.mxu0 0.0
  %188 = vmatprep.subr.mxu0 0.0
  %189 = vmatpush2.xpose.msra.mxu0 0.0
  %190 = vmatprep.subr.mxu0 0.0
  %191 = vmatpush2.xpose.msra.mxu0 0.0
  %192 = vmatprep.subr.mxu0 0.0
  %193 = vmatpush2.xpose.msra.mxu0 0.0
  %194 = vmatprep.mubr.f32.mxu0 0.0
  %195 = vmatmul.mubr.f32.gmra.mxu0 %v122
  %v196 = vpop.f32.mrf.mxu0
  %v197 = vadd.f32 %v119, %v196
  %v198 = vpop.f32.mrf.mxu0
  %199 = vmatprep.mubr.f32.mxu0 0.0
  %200 = vmatmul.mubr.f32.gmra.mxu0 %v125
  %v201 = vpop.f32.mrf.mxu0
  %v202 = vadd.f32 %v119, %v201
  %v203 = vpop.f32.mrf.mxu0
  %204 = vdwg.mxu0
  %v205 = vmax.f32 %v197, 0.0
  %v206 = vmax.f32 %v202, 0.0
  %s207 = scalar_lea.vmem %s1, 16
  %v208 = vld [vmem:[%s207] sm:$0xff]
  %s209 = scalar_lea.vmem %s2, 2
  %v210 = vld [vmem:[%s209] sm:$0x1]
  %v212 = vlaneseq
  %v213 = vshrl.u32 %v212, 7
  %v214 = vsub.s32 0, %v213
  %v215 = vrot.slane %v210, %v214
  %v218 = vsel %vm24, %v205, 0
  %v221 = vsel %vm24, %v206, 0
  %v224 = vsel %vm24, %v208, 0
  %226 = vmatprep.subr.mxu0 0.0
  %227 = vmatpush1.xpose.msra.mxu0 0.0
  %228 = vmatprep.subr.mxu0 0.0
  %229 = vmatpush1.xpose.msra.mxu0 0.0
  %230 = vmatprep.subr.mxu0 0.0
  %231 = vmatpush1.xpose.msra.mxu0 0.0
  %232 = vmatprep.subr.mxu0 0.0
  %233 = vmatpush1.xpose.msra.mxu0 0.0
  %234 = vmatprep.subr.mxu0 0.0
  %235 = vmatpush1.xpose.msra.mxu0 0.0
  %236 = vmatprep.subr.mxu0 0.0
  %237 = vmatpush1.xpose.msra.mxu0 0.0
  %238 = vmatprep.subr.mxu0 0.0
  %239 = vmatpush1.xpose.msra.mxu0 0.0
  %240 = vmatprep.subr.mxu0 0.0
  %241 = vmatpush1.xpose.msra.mxu0 0.0
  %242 = vmatprep.subr.mxu0 0.0
  %243 = vmatpush1.xpose.msra.mxu0 0.0
  %244 = vmatprep.subr.mxu0 0.0
  %245 = vmatpush1.xpose.msra.mxu0 0.0
  %246 = vmatprep.subr.mxu0 0.0
  %247 = vmatpush1.xpose.msra.mxu0 0.0
  %248 = vmatprep.subr.mxu0 0.0
  %249 = vmatpush1.xpose.msra.mxu0 0.0
  %250 = vmatprep.subr.mxu0 0.0
  %251 = vmatpush1.xpose.msra.mxu0 0.0
  %252 = vmatprep.subr.mxu0 0.0
  %253 = vmatpush1.xpose.msra.mxu0 0.0
  %254 = vmatprep.subr.mxu0 0.0
  %255 = vmatpush1.xpose.msra.mxu0 0.0
  %256 = vmatprep.subr.mxu0 0.0
  %257 = vmatpush1.xpose.msra.mxu0 %v224
  %258 = vmatprep.subr.mxu0 0.0
  %259 = vmatpush2.xpose.msra.mxu0 0.0
  %260 = vmatprep.subr.mxu0 0.0
  %261 = vmatpush2.xpose.msra.mxu0 0.0
  %262 = vmatprep.subr.mxu0 0.0
  %263 = vmatpush2.xpose.msra.mxu0 0.0
  %264 = vmatprep.subr.mxu0 0.0
  %265 = vmatpush2.xpose.msra.mxu0 0.0
  %266 = vmatprep.subr.mxu0 0.0
  %267 = vmatpush2.xpose.msra.mxu0 0.0
  %268 = vmatprep.subr.mxu0 0.0
  %269 = vmatpush2.xpose.msra.mxu0 0.0
  %270 = vmatprep.subr.mxu0 0.0
  %271 = vmatpush2.xpose.msra.mxu0 0.0
  %272 = vmatprep.subr.mxu0 0.0
  %273 = vmatpush2.xpose.msra.mxu0 0.0
  %274 = vmatprep.subr.mxu0 0.0
  %275 = vmatpush2.xpose.msra.mxu0 0.0
  %276 = vmatprep.subr.mxu0 0.0
  %277 = vmatpush2.xpose.msra.mxu0 0.0
  %278 = vmatprep.subr.mxu0 0.0
  %279 = vmatpush2.xpose.msra.mxu0 0.0
  %280 = vmatprep.subr.mxu0 0.0
  %281 = vmatpush2.xpose.msra.mxu0 0.0
  %282 = vmatprep.subr.mxu0 0.0
  %283 = vmatpush2.xpose.msra.mxu0 0.0
  %284 = vmatprep.subr.mxu0 0.0
  %285 = vmatpush2.xpose.msra.mxu0 0.0
  %286 = vmatprep.subr.mxu0 0.0
  %287 = vmatpush2.xpose.msra.mxu0 0.0
  %288 = vmatprep.subr.mxu0 0.0
  %289 = vmatpush2.xpose.msra.mxu0 0.0
  %290 = vmatprep.mubr.f32.mxu0 0.0
  %291 = vmatmul.mubr.f32.gmra.mxu0 %v218
  %v292 = vpop.f32.mrf.mxu0
  %v293 = vadd.f32 %v215, %v292
  %v294 = vpop.f32.mrf.mxu0
  %295 = vmatprep.mubr.f32.mxu0 0.0
  %296 = vmatmul.mubr.f32.gmra.mxu0 %v221
  %v297 = vpop.f32.mrf.mxu0
  %v298 = vadd.f32 %v215, %v297
  %v299 = vpop.f32.mrf.mxu0
  %300 = vdwg.mxu0
  %v301 = vlaneseq
  %v302 = vand.u32 %v301, 127
  %vm303 = vcmp.eq.s32.totalorder %v302, 4
  %v304 = vadd.f32 %v293, 3.1415927
  %v305 = vadd.f32 %v298, 3.1415927
  %v306 = vmul.f32 %v304, 0.15915494
  %v307 = vmul.f32 %v305, 0.15915494
  %v308 = vfloor.f32 %v306
  %v309 = vfloor.f32 %v307
  %v310 = vmul.f32 %v308, 6.2831855
  %v311 = vmul.f32 %v309, 6.2831855
  %v312 = vsub.f32 %v293, %v310
  %v313 = vsub.f32 %v298, %v311
  %v314 = vsel %vm303, %v312, %v293
  %v315 = vsel %vm303, %v313, %v298
  %v316 = vadd.f32 %v314, %v14
  %v317 = vadd.f32 %v315, %v15
  %v318 = vadd.f32 %v316, 3.1415927
  %v319 = vadd.f32 %v317, 3.1415927
  %v320 = vmul.f32 %v318, 0.15915494
  %v321 = vmul.f32 %v319, 0.15915494
  %v322 = vfloor.f32 %v320
  %v323 = vfloor.f32 %v321
  %v324 = vmul.f32 %v322, 6.2831855
  %v325 = vmul.f32 %v323, 6.2831855
  %v326 = vsub.f32 %v316, %v324
  %v327 = vsub.f32 %v317, %v325
  %v328 = vsel %vm303, %v326, %v316
  %v329 = vsel %vm303, %v327, %v317
  %330 = vst.msk [vmem:[%s3] sm:$0xff] %vm24, %v328
  %331 = vst.msk [vmem:[%s3 + $0x8] sm:$0xff] %vm24, %v329
  // Predicated region
  $region14: #{refine_3d_easy.1} parent=0 // pred_check
    _
  $region15: #{refine_3d_easy.1} parent=0 // pred_check_branch
    %333 = sbr.rel (0) target = $region17
  $region16: #{refine_3d_easy.1} parent=0 // pred_region
    _
  $region17: #{refine_3d_easy.1} parent=0 // pred_fallthru
    _
  // Predicated region
  $region18: #{refine_3d_easy.1} parent=0 // pred_check
    _
  $region19: #{refine_3d_easy.1} parent=0 // pred_check_branch
    %335 = sbr.rel (0) target = $region21
  $region20: #{refine_3d_easy.1} parent=0 // pred_region
    _
  $region21: #{refine_3d_easy.1} parent=0 // pred_fallthru
    _

</llo_original>
